<compile_context>
chip_gen: v7x
topology: tpu7x:2x2x1
jax: 0.10.0
libtpu: 0.0.40
codegen_flags: <defaults>
</compile_context>

<pallas_src>
import functools

import jax
import jax.numpy as jnp
from jax.experimental import pallas as pl
from jax.experimental.pallas import tpu as pltpu


def _round_up(x, m):
    return (x + m - 1) // m * m


def _vmem_budget_bytes():
    """Per-generation VMEM budget, with headroom below the physical cap."""
    try:
        cap = int(pltpu.get_tpu_info().vmem_capacity_bytes)
    except Exception:
        cap = 64 * 2 ** 20  # conservative default: v7x has 64 MiB per TensorCore
    # ~48 MiB on v7x (64 MiB), ~96 MiB on v5e/v6e (128 MiB).
    return max(16 * 2 ** 20, min(cap * 3 // 4, 100 * 2 ** 20))


def _spec(shape, index_map, buffers=None):
    """BlockSpec, optionally with an explicit pipeline buffer count."""
    if buffers is None:
        return pl.BlockSpec(shape, index_map)
    return pl.BlockSpec(shape, index_map, pipeline_mode=pl.Buffered(buffers))


def _pool_kernel(x_ref, w1_ref, b1_ref, o_ref, *, n_views, n_views_padded):
    # x_ref : (BB * n_views_padded, in_dim)   caller dtype (e.g. f32)
    # w1_ref: (in_dim, hidden_p)              bf16
    # b1_ref: (1, hidden_p)                   f32
    # o_ref : (BB, hidden_p)                  f32  = mean_N(ReLU(x @ w1 + b1))
    rows = x_ref.shape[0]
    bb, hidden_p = o_ref.shape

    # Cast to bf16 at the MXU input; accumulation stays f32 (hides under MXU).
    x = x_ref[...].astype(jnp.bfloat16)
    h = jnp.dot(x, w1_ref[...], preferred_element_type=jnp.float32) + b1_ref[...]
    h = jnp.maximum(h, 0.0)

    if n_views_padded != n_views:
        # Padded instance rows pass through ReLU(b1) != 0 -> zero them before
        # pooling so the mean stays exact.
        row = jax.lax.broadcasted_iota(jnp.int32, (rows, 1), 0)
        h = jnp.where(row % n_views_padded < n_views, h, 0.0)

    # Group-mean over n_views_padded consecutive rows per batch element.
    # f32 groups are sublane-multiples -> cheap in-tile sublane reduce.
    h = h.reshape(bb, n_views_padded, hidden_p)
    o_ref[...] = jnp.sum(h, axis=1) * (1.0 / n_views)


def _linear_kernel(h_ref, w_ref, b_ref, o_ref):
    # h_ref: (TB, hidden_p) f32 ; w_ref: (hidden_p, hidden_p) bf16
    # b_ref: (1, hidden_p)  f32 ; o_ref: (TB, hidden_p) caller dtype
    y = jnp.dot(h_ref[...].astype(w_ref.dtype), w_ref[...],
                preferred_element_type=jnp.float32) + b_ref[...]
    o_ref[...] = y.astype(o_ref.dtype)


def mivc_pooling(img_embeds, w1, b1, w2, b2, *, target_rows=512):
    """img_embeds: (B, N, in_dim) -> (B, hidden). Forward of MIVCPooling."""
    B, N, in_dim = img_embeds.shape
    hidden = w1.shape[1]
    out_dtype = img_embeds.dtype
    x_bytes = img_embeds.dtype.itemsize

    hidden_p = _round_up(hidden, 128)   # lane-dense weight columns / outputs
    n_p = _round_up(N, 8)               # sublane-aligned instance groups

    vmem_budget = _vmem_budget_bytes()

    # Resident (single-buffered) operand footprints.
    w1_bytes = in_dim * hidden_p * 2 + hidden_p * 4      # bf16 w1 + f32 b1
    w2_bytes = hidden_p * hidden_p * 2 + hidden_p * 4    # bf16 w2 + f32 b2
    if max(w1_bytes, w2_bytes) > vmem_budget // 2:
        # TODO(synk): add a K/N-tiled accumulator path for weights that do not
        # fit VMEM; for now fall back to plain XLA at transformer-scale dims.
        h = jnp.maximum(img_embeds @ w1 + b1, 0.0)
        return (jnp.mean(h, axis=1) @ w2 + b2).astype(out_dtype)

    # ---- choose per-step batch tile BB for the pooling kernel ---------------
    per_b_bytes = 2 * n_p * in_dim * x_bytes + 2 * hidden_p * 4  # x(2-buf)+out(2-buf)
    bb_vmem = max(1, int((vmem_budget - w1_bytes) // per_b_bytes))
    bb_rows = max(1, target_rows // n_p)                 # MXU row fill per step
    BB = max(1, min(B, bb_vmem, bb_rows))
    if BB >= B:
        BB = B
        if B >= 16:
            # Ensure >= 2 grid steps so v7x megacore can shard the batch axis.
            half = _round_up(pl.cdiv(B, 2), 8)
            if half < B:
                BB = half
    else:
        BB = max(8, BB // 8 * 8)        # output block must be sublane-aligned
    B_p = _round_up(B, BB)
    grid_a = (B_p // BB,)

    # Deepen x streaming to 3 buffers if the grid is long and the budget allows.
    x_buffers = None
    if (grid_a[0] >= 3 and
            3 * BB * n_p * in_dim * x_bytes + 2 * BB * hidden_p * 4 + w1_bytes
            <= vmem_budget):
        x_buffers = 3

    # ---- pad / flatten operands (zero padding is exact) ---------------------
    x = img_embeds
    if B_p != B or n_p != N:
        x = jnp.pad(x, ((0, B_p - B), (0, n_p - N), (0, 0)))
    x = x.reshape(B_p * n_p, in_dim)     # free row-major reshape in HBM

    w1_p, w2_p, b1_p, b2_p = w1, w2, b1, b2
    if hidden_p != hidden:
        w1_p = jnp.pad(w1, ((0, 0), (0, hidden_p - hidden)))
        w2_p = jnp.pad(w2, ((0, hidden_p - hidden), (0, hidden_p - hidden)))
        b1_p = jnp.pad(b1, (0, hidden_p - hidden))
        b2_p = jnp.pad(b2, (0, hidden_p - hidden))
    w1_p = w1_p.astype(jnp.bfloat16)
    w2_p = w2_p.astype(jnp.bfloat16)
    b1_p = b1_p.reshape(1, hidden_p).astype(jnp.float32)
    b2_p = b2_p.reshape(1, hidden_p).astype(jnp.float32)

    # ---- kernel 1: Linear1 + ReLU + mean over N ------------------------------
    pool_kernel = functools.partial(_pool_kernel, n_views=N, n_views_padded=n_p)
    flops_a = 2 * B_p * n_p * in_dim * hidden_p
    bytes_a = (x.size * x_bytes + w1_p.size * 2 + b1_p.size * 4
               + B_p * hidden_p * 4)

    def pool_call(buffered):
        return pl.pallas_call(
            pool_kernel,
            out_shape=jax.ShapeDtypeStruct((B_p, hidden_p), jnp.float32),
            grid_spec=pltpu.PrefetchScalarGridSpec(
                num_scalar_prefetch=0,
                grid=grid_a,
                in_specs=[
                    # Streaming activations (caller dtype, 2-D, lane-dense).
                    _spec((BB * n_p, in_dim), lambda b: (b, 0),
                          x_buffers if buffered else None),
                    # Resident weights/bias: constant index_map + single buffer.
                    _spec((in_dim, hidden_p), lambda b: (0, 0),
                          1 if buffered else None),
                    _spec((1, hidden_p), lambda b: (0, 0),
                          1 if buffered else None),
                ],
                out_specs=pl.BlockSpec((BB, hidden_p), lambda b: (b, 0)),
            ),
            compiler_params=pltpu.CompilerParams(
                dimension_semantics=("parallel",),
                vmem_limit_bytes=vmem_budget),
            cost_estimate=pl.CostEstimate(
                flops=flops_a, transcendentals=0, bytes_accessed=bytes_a),
        )(x, w1_p, b1_p)

    try:
        h_pool = jax.block_until_ready(pool_call(True))
    except Exception:
        # Fallback if this JAX build rejects pipeline_mode / Buffered counts.
        h_pool = pool_call(False)

    # ---- kernel 2: Linear2 over the full pooled batch ------------------------
    TB = B_p if B_p <= 1024 else 512
    B_p2 = _round_up(B_p, TB)
    if B_p2 != B_p:
        h_pool = jnp.pad(h_pool, ((0, B_p2 - B_p), (0, 0)))
    grid_b = (B_p2 // TB,)

    flops_b = 2 * B_p2 * hidden_p * hidden_p
    bytes_b = (B_p2 * hidden_p * 4 + w2_p.size * 2 + b2_p.size * 4
               + B_p2 * hidden_p * out_dtype.itemsize)

    def linear_call(buffered):
        return pl.pallas_call(
            _linear_kernel,
            out_shape=jax.ShapeDtypeStruct((B_p2, hidden_p), out_dtype),
            grid_spec=pltpu.PrefetchScalarGridSpec(
                num_scalar_prefetch=0,
                grid=grid_b,
                in_specs=[
                    pl.BlockSpec((TB, hidden_p), lambda i: (i, 0)),
                    _spec((hidden_p, hidden_p), lambda i: (0, 0),
                          1 if buffered else None),
                    _spec((1, hidden_p), lambda i: (0, 0),
                          1 if buffered else None),
                ],
                out_specs=pl.BlockSpec((TB, hidden_p), lambda i: (i, 0)),
            ),
            compiler_params=pltpu.CompilerParams(
                dimension_semantics=("parallel",),
                vmem_limit_bytes=vmem_budget),
            cost_estimate=pl.CostEstimate(
                flops=flops_b, transcendentals=0, bytes_accessed=bytes_b),
        )(h_pool, w2_p, b2_p)

    try:
        y = jax.block_until_ready(linear_call(True))
    except Exception:
        y = linear_call(False)

    # Strip batch / lane padding (already in the caller dtype).
    return y[:B, :hidden]


def mivc_pooling_ref(img_embeds, w1, b1, w2, b2):
    """Pure-JAX (f32) reference of the PyTorch forward."""
    h = jnp.maximum(img_embeds @ w1 + b1, 0.0)
    y = h @ w2 + b2
    return y.mean(axis=1)


if __name__ == "__main__":
    # Small shapes consistent with the module: batch=2, instances=8,
    # in_dim=32, hidden=32.
    B, N, in_dim, hidden = 2, 8, 32, 32

    key = jax.random.PRNGKey(0)
    kx, kw1, kb1, kw2, kb2 = jax.random.split(key, 5)

    img_embeds = jax.random.normal(kx, (B, N, in_dim), dtype=jnp.float32)

    # Parameters stored as (in_features, out_features).
    w1 = jax.random.normal(kw1, (in_dim, hidden), dtype=jnp.float32) * 0.1
    b1 = jax.random.normal(kb1, (hidden,), dtype=jnp.float32) * 0.1
    w2 = jax.random.normal(kw2, (hidden, hidden), dtype=jnp.float32) * 0.1
    b2 = jax.random.normal(kb2, (hidden,), dtype=jnp.float32) * 0.1

    out = jax.block_until_ready(mivc_pooling(img_embeds, w1, b1, w2, b2))

    ref = mivc_pooling_ref(img_embeds, w1, b1, w2, b2)
    assert out.shape == (B, hidden), out.shape
    # bf16 MXU matmuls (f32 accumulation) vs pure-f32 reference.
    assert jnp.allclose(out, ref, atol=2e-2, rtol=2e-2), \
        float(jnp.max(jnp.abs(out - ref)))

    print("KERNEL_OK")
</pallas_src>

<mosaic_0001>
module attributes {stable_mosaic.version = 11 : i64} {
  func.func @_pool_kernel(%arg0: i32, %arg1: memref<16x32xf32, #tpu.memory_space<vmem>>, %arg2: memref<32x128xbf16, #tpu.memory_space<vmem>>, %arg3: memref<1x128xf32, #tpu.memory_space<vmem>>, %arg4: memref<2x128xf32, #tpu.memory_space<vmem>>) attributes {dimension_semantics = [#tpu.dimension_semantics<parallel>], iteration_bounds = array<i64: 1>, scalar_prefetch = 0 : i64, scratch_operands = 0 : i64, tpu.core_type = #tpu.core_type<tc>, window_params = [{transform_indices = @transform_0, window_bounds = array<i64: 16, 32>}, {pipeline_mode = #tpu.pipeline_mode<synchronous>, transform_indices = @transform_1, window_bounds = array<i64: 32, 128>}, {pipeline_mode = #tpu.pipeline_mode<synchronous>, transform_indices = @transform_2, window_bounds = array<i64: 1, 128>}, {transform_indices = @transform_3, window_bounds = array<i64: 2, 128>}]} {
    %c0 = arith.constant 0 : index
    %c0_0 = arith.constant 0 : index
    %0 = vector.load %arg1[%c0, %c0_0] : memref<16x32xf32, #tpu.memory_space<vmem>>, vector<16x32xf32>
    %1 = arith.truncf %0 : vector<16x32xf32> to vector<16x32xbf16>
    %c0_1 = arith.constant 0 : index
    %c0_2 = arith.constant 0 : index
    %2 = vector.load %arg2[%c0_1, %c0_2] : memref<32x128xbf16, #tpu.memory_space<vmem>>, vector<32x128xbf16>
    %cst = arith.constant dense<0.000000e+00> : vector<16x128xf32>
    %3 = tpu.matmul %1, %2, %cst {dimension_numbers = #tpu.dot_dimension_numbers<[1], [0], [0], [1], [0, 0, 1, 1], [], []>} : vector<16x32xbf16>, vector<32x128xbf16>, vector<16x128xf32> -> vector<16x128xf32>
    %c0_3 = arith.constant 0 : index
    %c0_4 = arith.constant 0 : index
    %4 = vector.load %arg3[%c0_3, %c0_4] : memref<1x128xf32, #tpu.memory_space<vmem>>, vector<1x128xf32>
    %5 = vector.broadcast %4 : vector<1x128xf32> to vector<16x128xf32>
    %6 = arith.addf %3, %5 : vector<16x128xf32>
    %cst_5 = arith.constant 0.000000e+00 : f32
    %7 = vector.broadcast %cst_5 : f32 to vector<16x128xf32>
    %8 = arith.maximumf %6, %7 : vector<16x128xf32>
    %9 = vector.shape_cast %8 : vector<16x128xf32> to vector<2x8x128xf32>
    %cst_6 = arith.constant dense<0.000000e+00> : vector<2x128xf32>
    %10 = vector.multi_reduction <add>, %9, %cst_6 [1] : vector<2x8x128xf32> to vector<2x128xf32>
    %cst_7 = arith.constant 1.250000e-01 : f32
    %11 = vector.broadcast %cst_7 : f32 to vector<2x128xf32>
    %12 = arith.mulf %10, %11 : vector<2x128xf32>
    %c0_8 = arith.constant 0 : index
    %c0_9 = arith.constant 0 : index
    %13 = vector.load %arg4[%c0_8, %c0_9] : memref<2x128xf32, #tpu.memory_space<vmem>>, vector<2x128xf32>
    tpu.vector_store %arg4[%c0_8, %c0_9], %12 {strides = array<i32>} : memref<2x128xf32, #tpu.memory_space<vmem>>, vector<2x128xf32>,
    return
  }
  func.func @transform_0(%arg0: i32) -> (i32, i32) {
    %c0_i32 = arith.constant 0 : i32
    %c0_i32_0 = arith.constant 0 : i32
    return %arg0, %c0_i32 : i32, i32
  }
  func.func @transform_1(%arg0: i32) -> (i32, i32) {
    %c0_i32 = arith.constant 0 : i32
    %c0_i32_0 = arith.constant 0 : i32
    %c0_i32_1 = arith.constant 0 : i32
    return %c0_i32, %c0_i32_0 : i32, i32
  }
  func.func @transform_2(%arg0: i32) -> (i32, i32) {
    %c0_i32 = arith.constant 0 : i32
    %c0_i32_0 = arith.constant 0 : i32
    %c0_i32_1 = arith.constant 0 : i32
    return %c0_i32, %c0_i32_0 : i32, i32
  }
  func.func @transform_3(%arg0: i32) -> (i32, i32) {
    %c0_i32 = arith.constant 0 : i32
    %c0_i32_0 = arith.constant 0 : i32
    return %arg0, %c0_i32 : i32, i32
  }
}

module attributes {stable_mosaic.version = 11 : i64} {
  func.func @_pool_kernel(%arg0: i32, %arg1: memref<16x32xf32, #tpu.memory_space<vmem>>, %arg2: memref<32x128xbf16, #tpu.memory_space<vmem>>, %arg3: memref<1x128xf32, #tpu.memory_space<vmem>>, %arg4: memref<2x128xf32, #tpu.memory_space<vmem>>) attributes {dimension_semantics = [#tpu.dimension_semantics<parallel>], iteration_bounds = array<i64: 1>, scalar_prefetch = 0 : i64, scratch_operands = 0 : i64, tpu.core_type = #tpu.core_type<tc>, window_params = [{transform_indices = @transform_0, window_bounds = array<i64: 16, 32>}, {pipeline_mode = #tpu.pipeline_mode<synchronous>, transform_indices = @transform_1, window_bounds = array<i64: 32, 128>}, {pipeline_mode = #tpu.pipeline_mode<synchronous>, transform_indices = @transform_2, window_bounds = array<i64: 1, 128>}, {transform_indices = @transform_3, window_bounds = array<i64: 2, 128>}]} {
    %c0 = arith.constant 0 : index
    %c0_0 = arith.constant 0 : index
    %0 = vector.load %arg1[%c0, %c0_0] : memref<16x32xf32, #tpu.memory_space<vmem>>, vector<16x32xf32>
    %1 = arith.truncf %0 : vector<16x32xf32> to vector<16x32xbf16>
    %c0_1 = arith.constant 0 : index
    %c0_2 = arith.constant 0 : index
    %2 = vector.load %arg2[%c0_1, %c0_2] : memref<32x128xbf16, #tpu.memory_space<vmem>>, vector<32x128xbf16>
    %cst = arith.constant dense<0.000000e+00> : vector<16x128xf32>
    %3 = tpu.matmul %1, %2, %cst {dimension_numbers = #tpu.dot_dimension_numbers<[1], [0], [0], [1], [0, 0, 1, 1], [], []>} : vector<16x32xbf16>, vector<32x128xbf16>, vector<16x128xf32> -> vector<16x128xf32>
    %c0_3 = arith.constant 0 : index
    %c0_4 = arith.constant 0 : index
    %4 = vector.load %arg3[%c0_3, %c0_4] : memref<1x128xf32, #tpu.memory_space<vmem>>, vector<1x128xf32>
    %5 = vector.broadcast %4 : vector<1x128xf32> to vector<16x128xf32>
    %6 = arith.addf %3, %5 : vector<16x128xf32>
    %cst_5 = arith.constant 0.000000e+00 : f32
    %7 = vector.broadcast %cst_5 : f32 to vector<16x128xf32>
    %8 = arith.maximumf %6, %7 : vector<16x128xf32>
    %9 = vector.shape_cast %8 : vector<16x128xf32> to vector<2x8x128xf32>
    %cst_6 = arith.constant dense<0.000000e+00> : vector<2x128xf32>
    %10 = vector.multi_reduction <add>, %9, %cst_6 [1] : vector<2x8x128xf32> to vector<2x128xf32>
    %cst_7 = arith.constant 1.250000e-01 : f32
    %11 = vector.broadcast %cst_7 : f32 to vector<2x128xf32>
    %12 = arith.mulf %10, %11 : vector<2x128xf32>
    %c0_8 = arith.constant 0 : index
    %c0_9 = arith.constant 0 : index
    %13 = vector.load %arg4[%c0_8, %c0_9] : memref<2x128xf32, #tpu.memory_space<vmem>>, vector<2x128xf32>
    tpu.vector_store %arg4[%c0_8, %c0_9], %12 {strides = array<i32>} : memref<2x128xf32, #tpu.memory_space<vmem>>, vector<2x128xf32>,
    return
  }
  func.func @transform_0(%arg0: i32) -> (i32, i32) {
    %c0_i32 = arith.constant 0 : i32
    %c0_i32_0 = arith.constant 0 : i32
    return %arg0, %c0_i32 : i32, i32
  }
  func.func @transform_1(%arg0: i32) -> (i32, i32) {
    %c0_i32 = arith.constant 0 : i32
    %c0_i32_0 = arith.constant 0 : i32
    %c0_i32_1 = arith.constant 0 : i32
    return %c0_i32, %c0_i32_0 : i32, i32
  }
  func.func @transform_2(%arg0: i32) -> (i32, i32) {
    %c0_i32 = arith.constant 0 : i32
    %c0_i32_0 = arith.constant 0 : i32
    %c0_i32_1 = arith.constant 0 : i32
    return %c0_i32, %c0_i32_0 : i32, i32
  }
  func.func @transform_3(%arg0: i32) -> (i32, i32) {
    %c0_i32 = arith.constant 0 : i32
    %c0_i32_0 = arith.constant 0 : i32
    return %arg0, %c0_i32 : i32, i32
  }
}

</mosaic_0001>

<llo_original>
// kernel: tpu_custom_call.1
$region0: #{tpu_custom_call.1}
  #allocation0 [shape = 'u32[]', space=smem, size = 0x4, offset = 0x4, fixed_abs, tag = 'smem constant byte address 0x4 - core index']
  #allocation1 [shape = 'u32[144,128]{1,0:T(1,128)}', space=vmem, size = 0x12000, scoped, tag = 'internal scratch']
  %s0 = inlined_call_operand.hbm [shape: f32[16,32], index: 0, kind: input, shape index: {}]
  %s1 = inlined_call_operand.hbm [shape: bf16[32,128], index: 1, kind: input, shape index: {}]
  %s2 = inlined_call_operand.vmem [shape: f32[1,128], index: 2, kind: input, shape index: {}]
  %s3 = inlined_call_operand.hbm [shape: f32[2,128], index: 3, kind: output, shape index: {}]
  %s4 = sld [smem:[#allocation0]]
  $region30: #{tpu_custom_call.1} parent=0
    _
  %s6 = ssub.s32 1, %s4
  %s7 = scalar_select 0, %s6, %s4
  $region1: #{tpu_custom_call.1} parent=0
    #allocation2 [shape = 'u8[8192]{0}', space=vmem, size = 0x2000, scoped, tag = 'input window, operand 0, single buffered']
    #allocation3 [shape = 's32[1]{0}', space=sflag, size = 0x4, scoped, tag = 'scoped memory for tpu_custom_call.1']
    #allocation4 [shape = 's32[1]{0}', space=sflag, size = 0x4, scoped, tag = 'scoped memory for tpu_custom_call.1']
    #allocation5 [shape = 'u8[8192]{0}', space=vmem, size = 0x2000, scoped, tag = 'input window, operand 1, single buffered']
    #allocation6 [shape = 's32[1]{0}', space=sflag, size = 0x4, scoped, tag = 'scoped memory for tpu_custom_call.1']
    #allocation7 [shape = 'u8[1024]{0}', space=vmem, size = 0x400, scoped, tag = 'output window, operand 0, single buffered']
    %8 = vsyncpa [#allocation3], 0
    %9 = vsyncpa [#allocation6], 0
    %10 = vsyncpa [#allocation4], 0
    // Predicated region
    $region2: #{tpu_custom_call.1} parent=1 // pred_check
      _
    $region3: #{tpu_custom_call.1} parent=1 // pred_check_branch
      %12 = sbr.rel (0) target = $region5
    $region4: #{tpu_custom_call.1} parent=1 // pred_region
      %s14 = ssub.s32 256, 256
      %15 = vsyncadd [#allocation3], %s14
      %s16 = sshll.u32 [#allocation2], 4
      %s17 = int_to_ptr.vmem [resolvable:$true] %s16
      %22 = dma.hbm_to_vmem [thread:$0]  %s0, 256, %s17, [#allocation3], 128, 128, 8
    $region5: #{tpu_custom_call.1} parent=1 // pred_fallthru
      _
    // Predicated region
    $region6: #{tpu_custom_call.1} parent=1 // pred_check
      _
    $region7: #{tpu_custom_call.1} parent=1 // pred_check_branch
      %24 = sbr.rel (0) target = $region9
    $region8: #{tpu_custom_call.1} parent=1 // pred_region
      %s26 = ssub.s32 256, 256
      %27 = vsyncadd [#allocation6], %s26
      %s28 = sshll.u32 [#allocation5], 4
      %s29 = int_to_ptr.vmem [resolvable:$true] %s28
      %34 = dma.hbm_to_vmem [thread:$0]  %s1, 256, %s29, [#allocation6], 64, 64, 4
    $region9: #{tpu_custom_call.1} parent=1 // pred_fallthru
      _
    // Predicated region
    $region10: #{tpu_custom_call.1} parent=1 // pred_check
      _
    $region11: #{tpu_custom_call.1} parent=1 // pred_check_branch
      %36 = sbr.rel (0) target = $region13
    $region12: #{tpu_custom_call.1} parent=1 // pred_region
      _
    $region13: #{tpu_custom_call.1} parent=1 // pred_fallthru
      _
    // Predicated region
    $region14: #{tpu_custom_call.1} parent=1 // pred_check
      _
    $region15: #{tpu_custom_call.1} parent=1 // pred_check_branch
      %38 = sbr.rel (0) target = $region17
    $region16: #{tpu_custom_call.1} parent=1 // pred_region
      %39 = dma.done [#allocation3], 256
    $region17: #{tpu_custom_call.1} parent=1 // pred_fallthru
      _
    // Predicated region
    $region18: #{tpu_custom_call.1} parent=1 // pred_check
      _
    $region19: #{tpu_custom_call.1} parent=1 // pred_check_branch
      %41 = sbr.rel (0) target = $region21
    $region20: #{tpu_custom_call.1} parent=1 // pred_region
      %42 = dma.done [#allocation6], 256
    $region21: #{tpu_custom_call.1} parent=1 // pred_fallthru
      _
    %v44 = vld [vmem:[#allocation2] sm:$0xff]
    %v45 = vld [vmem:[#allocation2 + $0x8] sm:$0xff]
    %v46 = vpack.c.bf16 %v45, %v44
    %v47 = vld [vmem:[#allocation5] sm:$0xf]
    %v48 = vld [vmem:[#allocation5 + $0x4] sm:$0xf]
    %v49 = vld [vmem:[#allocation5 + $0x8] sm:$0xf]
    %v50 = vld [vmem:[#allocation5 + $0xc] sm:$0xf]
    %v51 = vld [vmem:[%s2] sm:$0x1]
    %v53 = vlaneseq
    %v54 = vshrl.u32 %v53, 7
    %v55 = vsub.s32 0, %v54
    %v56 = vrot.slane %v51, %v55
    %v62 = vunpack.c.l.b16 %v47
    %v63 = vunpack.c.l.b16 %v48
    %v64 = vunpack.c.l.b16 %v49
    %v65 = vunpack.c.l.b16 %v50
    %v66 = vpack.c.b16 %v63, %v62
    %v67 = vpack.c.b16 %v65, %v64
    %vm70 = vcmask 261120
    %v72 = vsel %vm70, %v46, 0
    %74 = vmatprep.subr.bf16.mxu0 0
    %75 = vmatpush1.bf16.msra.mxu0 %v66
    %76 = vmatprep.subr.bf16.mxu0 0
    %77 = vmatpush1.bf16.msra.mxu0 %v67
    %78 = vmatprep.subr.bf16.mxu0 0
    %79 = vmatpush1.bf16.msra.mxu0 0
    %80 = vmatprep.subr.bf16.mxu0 0
    %81 = vmatpush1.bf16.msra.mxu0 0
    %82 = vmatprep.subr.bf16.mxu0 0
    %83 = vmatpush1.bf16.msra.mxu0 0
    %84 = vmatprep.subr.bf16.mxu0 0
    %85 = vmatpush1.bf16.msra.mxu0 0
    %86 = vmatprep.subr.bf16.mxu0 0
    %87 = vmatpush1.bf16.msra.mxu0 0
    %88 = vmatprep.subr.bf16.mxu0 0
    %89 = vmatpush1.bf16.msra.mxu0 0
    %90 = vmatprep.subr.bf16.mxu0 0
    %91 = vmatpush1.bf16.msra.mxu0 0
    %92 = vmatprep.subr.bf16.mxu0 0
    %93 = vmatpush1.bf16.msra.mxu0 0
    %94 = vmatprep.subr.bf16.mxu0 0
    %95 = vmatpush1.bf16.msra.mxu0 0
    %96 = vmatprep.subr.bf16.mxu0 0
    %97 = vmatpush1.bf16.msra.mxu0 0
    %98 = vmatprep.subr.bf16.mxu0 0
    %99 = vmatpush1.bf16.msra.mxu0 0
    %100 = vmatprep.subr.bf16.mxu0 0
    %101 = vmatpush1.bf16.msra.mxu0 0
    %102 = vmatprep.subr.bf16.mxu0 0
    %103 = vmatpush1.bf16.msra.mxu0 0
    %104 = vmatprep.subr.bf16.mxu0 0
    %105 = vmatpush1.bf16.msra.mxu0 0
    %106 = vmatprep.mubr.bf16.mxu0 0
    %107 = vmatmul.mubr.bf16.gmra.mrb[0].mxu0 %v72
    %v108 = vpop.f32.mrb[0].mxu0
    %v109 = vadd.f32 %v56, %v108
    %v110 = vpop.f32.mrb[0].mxu0
    %v111 = vpop.f32.mrb[0].mxu0
    %v112 = vadd.f32 %v56, %v111
    %v113 = vpop.f32.mrb[0].mxu0
    %114 = vdwg.mxu0
    %v115 = vmax.f32 %v109, 0.0
    %v116 = vmax.f32 %v112, 0.0
    %v117 = vrot.slane %v115, 4
    %v118 = vadd.f32 %v115, %v117
    %v119 = vrot.slane %v118, 2
    %v120 = vadd.f32 %v118, %v119
    %v121 = vrot.slane %v120, 1
    %v122 = vadd.f32 %v120, %v121
    %v123 = vrot.slane %v116, 4
    %v124 = vadd.f32 %v116, %v123
    %v125 = vrot.slane %v124, 2
    %v126 = vadd.f32 %v124, %v125
    %v127 = vrot.slane %v126, 1
    %v128 = vadd.f32 %v126, %v127
    %v129 = vmul.f32 %v122, 0.125
    %v130 = vmul.f32 %v128, 0.125
    %vm133 = vcmask 1041409
    %v134 = vsel %vm133, %v130, %v129
    %136 = vst [vmem:[#allocation7] sm:$0x3] %v134
    // Predicated region
    $region22: #{tpu_custom_call.1} parent=1 // pred_check
      _
    $region23: #{tpu_custom_call.1} parent=1 // pred_check_branch
      %138 = sbr.rel (0) target = $region25
    $region24: #{tpu_custom_call.1} parent=1 // pred_region
      %s140 = ssub.s32 32, 32
      %141 = vsyncadd [#allocation4], %s140
      %s143 = sshll.u32 [#allocation7], 4
      %s144 = int_to_ptr.vmem [resolvable:$true] %s143
      %146 = dma.vmem_to_hbm [thread:$0]  %s144, 32, %s3, [#allocation4]
    $region25: #{tpu_custom_call.1} parent=1 // pred_fallthru
      _
    // Predicated region
    $region26: #{tpu_custom_call.1} parent=1 // pred_check
      _
    $region27: #{tpu_custom_call.1} parent=1 // pred_check_branch
      %148 = sbr.rel (0) target = $region29
    $region28: #{tpu_custom_call.1} parent=1 // pred_region
      %149 = dma.done [#allocation4], 32
    $region29: #{tpu_custom_call.1} parent=1 // pred_fallthru
      _
    %150 = vsyncpa [#allocation3], 1
    %151 = vsyncpa [#allocation6], 1
    %152 = vsyncpa [#allocation4], 1

// kernel: tpu_custom_call.1
$region0: #{tpu_custom_call.1}
  #allocation0 [shape = 'u32[]', space=smem, size = 0x4, offset = 0x4, fixed_abs, tag = 'smem constant byte address 0x4 - core index']
  #allocation1 [shape = 'u32[144,128]{1,0:T(1,128)}', space=vmem, size = 0x12000, scoped, tag = 'internal scratch']
  %s0 = inlined_call_operand.hbm [shape: f32[16,32], index: 0, kind: input, shape index: {}]
  %s1 = inlined_call_operand.hbm [shape: bf16[32,128], index: 1, kind: input, shape index: {}]
  %s2 = inlined_call_operand.vmem [shape: f32[1,128], index: 2, kind: input, shape index: {}]
  %s3 = inlined_call_operand.hbm [shape: f32[2,128], index: 3, kind: output, shape index: {}]
  %s4 = sld [smem:[#allocation0]]
  $region30: #{tpu_custom_call.1} parent=0
    _
  %s6 = ssub.s32 1, %s4
  %s7 = scalar_select 0, %s6, %s4
  $region1: #{tpu_custom_call.1} parent=0
    #allocation2 [shape = 'u8[8192]{0}', space=vmem, size = 0x2000, scoped, tag = 'input window, operand 0, single buffered']
    #allocation3 [shape = 's32[1]{0}', space=sflag, size = 0x4, scoped, tag = 'scoped memory for tpu_custom_call.1']
    #allocation4 [shape = 's32[1]{0}', space=sflag, size = 0x4, scoped, tag = 'scoped memory for tpu_custom_call.1']
    #allocation5 [shape = 'u8[8192]{0}', space=vmem, size = 0x2000, scoped, tag = 'input window, operand 1, single buffered']
    #allocation6 [shape = 's32[1]{0}', space=sflag, size = 0x4, scoped, tag = 'scoped memory for tpu_custom_call.1']
    #allocation7 [shape = 'u8[1024]{0}', space=vmem, size = 0x400, scoped, tag = 'output window, operand 0, single buffered']
    %8 = vsyncpa [#allocation3], 0
    %9 = vsyncpa [#allocation6], 0
    %10 = vsyncpa [#allocation4], 0
    // Predicated region
    $region2: #{tpu_custom_call.1} parent=1 // pred_check
      _
    $region3: #{tpu_custom_call.1} parent=1 // pred_check_branch
      %12 = sbr.rel (0) target = $region5
    $region4: #{tpu_custom_call.1} parent=1 // pred_region
      %s14 = ssub.s32 256, 256
      %15 = vsyncadd [#allocation3], %s14
      %s16 = sshll.u32 [#allocation2], 4
      %s17 = int_to_ptr.vmem [resolvable:$true] %s16
      %22 = dma.hbm_to_vmem [thread:$0]  %s0, 256, %s17, [#allocation3], 128, 128, 8
    $region5: #{tpu_custom_call.1} parent=1 // pred_fallthru
      _
    // Predicated region
    $region6: #{tpu_custom_call.1} parent=1 // pred_check
      _
    $region7: #{tpu_custom_call.1} parent=1 // pred_check_branch
      %24 = sbr.rel (0) target = $region9
    $region8: #{tpu_custom_call.1} parent=1 // pred_region
      %s26 = ssub.s32 256, 256
      %27 = vsyncadd [#allocation6], %s26
      %s28 = sshll.u32 [#allocation5], 4
      %s29 = int_to_ptr.vmem [resolvable:$true] %s28
      %34 = dma.hbm_to_vmem [thread:$0]  %s1, 256, %s29, [#allocation6], 64, 64, 4
    $region9: #{tpu_custom_call.1} parent=1 // pred_fallthru
      _
    // Predicated region
    $region10: #{tpu_custom_call.1} parent=1 // pred_check
      _
    $region11: #{tpu_custom_call.1} parent=1 // pred_check_branch
      %36 = sbr.rel (0) target = $region13
    $region12: #{tpu_custom_call.1} parent=1 // pred_region
      _
    $region13: #{tpu_custom_call.1} parent=1 // pred_fallthru
      _
    // Predicated region
    $region14: #{tpu_custom_call.1} parent=1 // pred_check
      _
    $region15: #{tpu_custom_call.1} parent=1 // pred_check_branch
      %38 = sbr.rel (0) target = $region17
    $region16: #{tpu_custom_call.1} parent=1 // pred_region
      %39 = dma.done [#allocation3], 256
    $region17: #{tpu_custom_call.1} parent=1 // pred_fallthru
      _
    // Predicated region
    $region18: #{tpu_custom_call.1} parent=1 // pred_check
      _
    $region19: #{tpu_custom_call.1} parent=1 // pred_check_branch
      %41 = sbr.rel (0) target = $region21
    $region20: #{tpu_custom_call.1} parent=1 // pred_region
      %42 = dma.done [#allocation6], 256
    $region21: #{tpu_custom_call.1} parent=1 // pred_fallthru
      _
    %v44 = vld [vmem:[#allocation2] sm:$0xff]
    %v45 = vld [vmem:[#allocation2 + $0x8] sm:$0xff]
    %v46 = vpack.c.bf16 %v45, %v44
    %v47 = vld [vmem:[#allocation5] sm:$0xf]
    %v48 = vld [vmem:[#allocation5 + $0x4] sm:$0xf]
    %v49 = vld [vmem:[#allocation5 + $0x8] sm:$0xf]
    %v50 = vld [vmem:[#allocation5 + $0xc] sm:$0xf]
    %v51 = vld [vmem:[%s2] sm:$0x1]
    %v53 = vlaneseq
    %v54 = vshrl.u32 %v53, 7
    %v55 = vsub.s32 0, %v54
    %v56 = vrot.slane %v51, %v55
    %v62 = vunpack.c.l.b16 %v47
    %v63 = vunpack.c.l.b16 %v48
    %v64 = vunpack.c.l.b16 %v49
    %v65 = vunpack.c.l.b16 %v50
    %v66 = vpack.c.b16 %v63, %v62
    %v67 = vpack.c.b16 %v65, %v64
    %vm70 = vcmask 261120
    %v72 = vsel %vm70, %v46, 0
    %74 = vmatprep.subr.bf16.mxu0 0
    %75 = vmatpush1.bf16.msra.mxu0 %v66
    %76 = vmatprep.subr.bf16.mxu0 0
    %77 = vmatpush1.bf16.msra.mxu0 %v67
    %78 = vmatprep.subr.bf16.mxu0 0
    %79 = vmatpush1.bf16.msra.mxu0 0
    %80 = vmatprep.subr.bf16.mxu0 0
    %81 = vmatpush1.bf16.msra.mxu0 0
    %82 = vmatprep.subr.bf16.mxu0 0
    %83 = vmatpush1.bf16.msra.mxu0 0
    %84 = vmatprep.subr.bf16.mxu0 0
    %85 = vmatpush1.bf16.msra.mxu0 0
    %86 = vmatprep.subr.bf16.mxu0 0
    %87 = vmatpush1.bf16.msra.mxu0 0
    %88 = vmatprep.subr.bf16.mxu0 0
    %89 = vmatpush1.bf16.msra.mxu0 0
    %90 = vmatprep.subr.bf16.mxu0 0
    %91 = vmatpush1.bf16.msra.mxu0 0
    %92 = vmatprep.subr.bf16.mxu0 0
    %93 = vmatpush1.bf16.msra.mxu0 0
    %94 = vmatprep.subr.bf16.mxu0 0
    %95 = vmatpush1.bf16.msra.mxu0 0
    %96 = vmatprep.subr.bf16.mxu0 0
    %97 = vmatpush1.bf16.msra.mxu0 0
    %98 = vmatprep.subr.bf16.mxu0 0
    %99 = vmatpush1.bf16.msra.mxu0 0
    %100 = vmatprep.subr.bf16.mxu0 0
    %101 = vmatpush1.bf16.msra.mxu0 0
    %102 = vmatprep.subr.bf16.mxu0 0
    %103 = vmatpush1.bf16.msra.mxu0 0
    %104 = vmatprep.subr.bf16.mxu0 0
    %105 = vmatpush1.bf16.msra.mxu0 0
    %106 = vmatprep.mubr.bf16.mxu0 0
    %107 = vmatmul.mubr.bf16.gmra.mrb[0].mxu0 %v72
    %v108 = vpop.f32.mrb[0].mxu0
    %v109 = vadd.f32 %v56, %v108
    %v110 = vpop.f32.mrb[0].mxu0
    %v111 = vpop.f32.mrb[0].mxu0
    %v112 = vadd.f32 %v56, %v111
    %v113 = vpop.f32.mrb[0].mxu0
    %114 = vdwg.mxu0
    %v115 = vmax.f32 %v109, 0.0
    %v116 = vmax.f32 %v112, 0.0
    %v117 = vrot.slane %v115, 4
    %v118 = vadd.f32 %v115, %v117
    %v119 = vrot.slane %v118, 2
    %v120 = vadd.f32 %v118, %v119
    %v121 = vrot.slane %v120, 1
    %v122 = vadd.f32 %v120, %v121
    %v123 = vrot.slane %v116, 4
    %v124 = vadd.f32 %v116, %v123
    %v125 = vrot.slane %v124, 2
    %v126 = vadd.f32 %v124, %v125
    %v127 = vrot.slane %v126, 1
    %v128 = vadd.f32 %v126, %v127
    %v129 = vmul.f32 %v122, 0.125
    %v130 = vmul.f32 %v128, 0.125
    %vm133 = vcmask 1041409
    %v134 = vsel %vm133, %v130, %v129
    %136 = vst [vmem:[#allocation7] sm:$0x3] %v134
    // Predicated region
    $region22: #{tpu_custom_call.1} parent=1 // pred_check
      _
    $region23: #{tpu_custom_call.1} parent=1 // pred_check_branch
      %138 = sbr.rel (0) target = $region25
    $region24: #{tpu_custom_call.1} parent=1 // pred_region
      %s140 = ssub.s32 32, 32
      %141 = vsyncadd [#allocation4], %s140
      %s143 = sshll.u32 [#allocation7], 4
      %s144 = int_to_ptr.vmem [resolvable:$true] %s143
      %146 = dma.vmem_to_hbm [thread:$0]  %s144, 32, %s3, [#allocation4]
    $region25: #{tpu_custom_call.1} parent=1 // pred_fallthru
      _
    // Predicated region
    $region26: #{tpu_custom_call.1} parent=1 // pred_check
      _
    $region27: #{tpu_custom_call.1} parent=1 // pred_check_branch
      %148 = sbr.rel (0) target = $region29
    $region28: #{tpu_custom_call.1} parent=1 // pred_region
      %149 = dma.done [#allocation4], 32
    $region29: #{tpu_custom_call.1} parent=1 // pred_fallthru
      _
    %150 = vsyncpa [#allocation3], 1
    %151 = vsyncpa [#allocation6], 1
    %152 = vsyncpa [#allocation4], 1

</llo_original>
